<compile_context>
chip_gen: v7x
topology: tpu7x:2x2x1
jax: 0.10.0
libtpu: 0.0.40
codegen_flags: <defaults>
</compile_context>

<pallas_src>
import functools

import jax
import jax.numpy as jnp
from jax import lax
from jax.experimental import pallas as pl
from jax.experimental.pallas import tpu as pltpu


def _attention_kernel(xq_ref, xkv_ref, wq_ref, wkv_ref, o_ref,
                      q_scr, m_scr, l_scr, acc_scr):
    ki = pl.program_id(2)
    hp = acc_scr.shape[-1]

    @pl.when(ki == 0)
    def _init():
        # Project Q once per (batch, q-tile); reused across all KV steps.
        q_scr[...] = jnp.dot(
            xq_ref[...], wq_ref[...],
            preferred_element_type=jnp.float32).astype(q_scr.dtype)
        m_scr[...] = jnp.full(m_scr.shape, -jnp.inf, dtype=m_scr.dtype)
        l_scr[...] = jnp.zeros(l_scr.shape, dtype=l_scr.dtype)
        acc_scr[...] = jnp.zeros(acc_scr.shape, dtype=acc_scr.dtype)

    # K/V projection for this KV tile: one wide (tk,H)x(H,2H) matmul, then
    # split along lanes at the 128-aligned boundary hp.
    kv = jnp.dot(xkv_ref[...], wkv_ref[...],
                 preferred_element_type=jnp.float32).astype(xkv_ref.dtype)
    k = kv[:, :hp]          # (tk, hp)
    v = kv[:, hp:]          # (tk, hp)

    # score = Q K^T without materializing a transpose (MXU-native contraction).
    q = q_scr[...]
    s = lax.dot_general(q, k, (((1,), (1,)), ((), ())),
                        preferred_element_type=jnp.float32)       # (tq, tk)

    # Online softmax (f32 statistics).
    m_prev = m_scr[...]
    m_new = jnp.maximum(m_prev, jnp.max(s, axis=-1, keepdims=True))
    alpha = jnp.exp(m_prev - m_new)
    p = jnp.exp(s - m_new)
    l_scr[...] = alpha * l_scr[...] + jnp.sum(p, axis=-1, keepdims=True)
    acc_scr[...] = alpha * acc_scr[...] + jnp.dot(
        p.astype(v.dtype), v, preferred_element_type=jnp.float32)
    m_scr[...] = m_new

    @pl.when(ki == pl.num_programs(2) - 1)
    def _finalize():
        inv_l = pl.reciprocal(l_scr[...], approx=True)   # EUP vrcp, ~free
        o_ref[...] = (acc_scr[...] * inv_l).astype(o_ref.dtype)


def _seq_tile(s):
    """Largest clean tile: full extent if small, else a 128-multiple divisor."""
    if s <= 512:
        return s
    for t in (512, 256, 128):
        if s % t == 0:
            return t
    return s  # ragged S: fall back to a single tile (see TODO above).


def _pad2(w_t, hp):
    """Zero-pad a pre-transposed [h_in, h_out] weight to [hp, hp]."""
    h_in, h_out = w_t.shape
    return jnp.pad(w_t, ((0, hp - h_in), (0, hp - h_out)))


def _vmem_budget_bytes(tq, tk, hp, itemsize):
    x_tiles = 2 * (tq + tk) * hp * itemsize          # double-buffered x tiles
    weights = 3 * hp * hp * itemsize * 2             # Wq + fused Wkv (2 bufs)
    out_tiles = 2 * tq * hp * itemsize               # double-buffered output
    scratch = tq * hp * itemsize + (tq * hp + 2 * tq) * 4
    temps = (3 * tk * hp + 2 * tq * tk) * 4          # kv / score / exp values
    return x_tiles + weights + out_tiles + scratch + temps


@jax.jit
def basic_attention(x, wq, wk, wv):
    """x: [b, s, h]; wq/wk/wv: [h, h] in PyTorch [out, in] layout."""
    b, s, h = x.shape

    # Lane-dense hidden dim: pad H up to a multiple of 128 (exact: padded
    # Q/K/V columns are all zero, so scores and outputs are unchanged).
    hp = -(-h // 128) * 128
    x_p = x if hp == h else jnp.pad(x, ((0, 0), (0, 0), (0, hp - h)))

    # Pre-transpose weights to [h_in, h_out]; fuse K and V into [hp, 2*hp].
    wq_tp = _pad2(wq.T, hp)
    wkv_tp = jnp.concatenate([_pad2(wk.T, hp), _pad2(wv.T, hp)], axis=1)

    tq = _seq_tile(s)
    tk = _seq_tile(s)
    n_q = s // tq
    n_k = s // tk

    budget = _vmem_budget_bytes(tq, tk, hp, x.dtype.itemsize)
    vmem_limit = None
    if budget > 24 * 1024 * 1024:
        vmem_limit = min(int(budget * 1.5), 96 * 1024 * 1024)

    out_p = pl.pallas_call(
        _attention_kernel,
        out_shape=jax.ShapeDtypeStruct((b, s, hp), x.dtype),
        grid_spec=pltpu.PrefetchScalarGridSpec(
            num_scalar_prefetch=0,
            grid=(b, n_q, n_k),
            in_specs=[
                # x rows for the query tile
                pl.BlockSpec((pl.Squeezed(), tq, hp),
                             lambda bi, qi, ki: (bi, qi, 0)),
                # x rows for the key/value tile
                pl.BlockSpec((pl.Squeezed(), tk, hp),
                             lambda bi, qi, ki: (bi, ki, 0)),
                # constant weight blocks (index map never changes -> no refetch)
                pl.BlockSpec((hp, hp), lambda bi, qi, ki: (0, 0)),
                pl.BlockSpec((hp, 2 * hp), lambda bi, qi, ki: (0, 0)),
            ],
            out_specs=pl.BlockSpec((pl.Squeezed(), tq, hp),
                                   lambda bi, qi, ki: (bi, qi, 0)),
            scratch_shapes=[
                pltpu.VMEM((tq, hp), x.dtype),        # Q tile (input dtype)
                pltpu.VMEM((tq, 1), jnp.float32),     # running max m
                pltpu.VMEM((tq, 1), jnp.float32),     # running denom l
                pltpu.VMEM((tq, hp), jnp.float32),    # f32 output accumulator
            ],
        ),
        compiler_params=pltpu.CompilerParams(
            dimension_semantics=("parallel", "parallel", "arbitrary"),
            vmem_limit_bytes=vmem_limit),
    )(x_p, x_p, wq_tp, wkv_tp)

    return out_p if hp == h else out_p[..., :h]


def _reference(x, wq, wk, wv):
    q = x @ wq.T
    k = x @ wk.T
    v = x @ wv.T
    score = jnp.einsum("bqh,bkh->bqk", q, k)
    prob = jax.nn.softmax(score, axis=-1)
    return jnp.einsum("bqk,bkh->bqh", prob, v)


if __name__ == "__main__":
    B, S, H = 2, 8, 32
    key = jax.random.PRNGKey(0)
    k_x, k_q, k_k, k_v = jax.random.split(key, 4)

    x = jax.random.normal(k_x, (B, S, H), dtype=jnp.float32)
    # Deterministic parameter init (uniform, roughly like nn.Linear default)
    bound = 1.0 / (H ** 0.5)
    wq = jax.random.uniform(k_q, (H, H), jnp.float32, -bound, bound)
    wk = jax.random.uniform(k_k, (H, H), jnp.float32, -bound, bound)
    wv = jax.random.uniform(k_v, (H, H), jnp.float32, -bound, bound)

    out = basic_attention(x, wq, wk, wv)
    out = jax.block_until_ready(out)

    ref = _reference(x, wq, wk, wv)
    assert out.shape == ref.shape
    # Tolerance relaxed vs f32-exact because the softmax normalization uses the
    # EUP approximate reciprocal (pl.reciprocal(approx=True)); accumulation is f32.
    assert jnp.allclose(out, ref, atol=2e-3, rtol=2e-3), "mismatch vs reference"
    print("KERNEL_OK")
</pallas_src>

<mosaic_0001>
module attributes {stable_mosaic.version = 11 : i64} {
  func.func @_attention_kernel(%arg0: i32, %arg1: i32, %arg2: i32, %arg3: memref<1x8x128xf32, #tpu.memory_space<vmem>>, %arg4: memref<1x8x128xf32, #tpu.memory_space<vmem>>, %arg5: memref<128x128xf32, #tpu.memory_space<vmem>>, %arg6: memref<128x256xf32, #tpu.memory_space<vmem>>, %arg7: memref<1x8x128xf32, #tpu.memory_space<vmem>>, %arg8: memref<8x128xf32, #tpu.memory_space<vmem>>, %arg9: memref<8x1xf32, #tpu.memory_space<vmem>>, %arg10: memref<8x1xf32, #tpu.memory_space<vmem>>, %arg11: memref<8x128xf32, #tpu.memory_space<vmem>>) attributes {dimension_semantics = [#tpu.dimension_semantics<parallel>, #tpu.dimension_semantics<parallel>, #tpu.dimension_semantics<arbitrary>], iteration_bounds = array<i64: 2, 1, 1>, scalar_prefetch = 0 : i64, scratch_operands = 4 : i64, tpu.core_type = #tpu.core_type<tc>, window_params = [{transform_indices = @transform_0, window_bounds = array<i64: 1, 8, 128>}, {transform_indices = @transform_1, window_bounds = array<i64: 1, 8, 128>}, {pipeline_mode = #tpu.pipeline_mode<synchronous>, transform_indices = @transform_2, window_bounds = array<i64: 128, 128>}, {pipeline_mode = #tpu.pipeline_mode<synchronous>, transform_indices = @transform_3, window_bounds = array<i64: 128, 256>}, {transform_indices = @transform_4, window_bounds = array<i64: 1, 8, 128>}]} {
    %c0_i32 = arith.constant 0 : i32
    %0 = arith.cmpi eq, %arg2, %c0_i32 : i32
    %1 = arith.extui %0 : i1 to i32
    %c0_i32_0 = arith.constant 0 : i32
    %2 = arith.cmpi ne, %1, %c0_i32_0 : i32
    scf.if %2 {
      %c0_25 = arith.constant 0 : index
      %c0_26 = arith.constant 0 : index
      %c0_27 = arith.constant 0 : index
      %36 = vector.load %arg3[%c0_25, %c0_26, %c0_27] : memref<1x8x128xf32, #tpu.memory_space<vmem>>, vector<1x8x128xf32>
      %37 = vector.shape_cast %36 : vector<1x8x128xf32> to vector<8x128xf32>
      %c0_28 = arith.constant 0 : index
      %c0_29 = arith.constant 0 : index
      %38 = vector.load %arg5[%c0_28, %c0_29] : memref<128x128xf32, #tpu.memory_space<vmem>>, vector<128x128xf32>
      %cst_30 = arith.constant dense<0.000000e+00> : vector<8x128xf32>
      %39 = tpu.matmul %37, %38, %cst_30 {dimension_numbers = #tpu.dot_dimension_numbers<[1], [0], [0], [1], [0, 0, 1, 1], [], []>} : vector<8x128xf32>, vector<128x128xf32>, vector<8x128xf32> -> vector<8x128xf32>
      %c0_31 = arith.constant 0 : index
      %c0_32 = arith.constant 0 : index
      %40 = vector.load %arg8[%c0_31, %c0_32] : memref<8x128xf32, #tpu.memory_space<vmem>>, vector<8x128xf32>
      tpu.vector_store %arg8[%c0_31, %c0_32], %39 {strides = array<i32>} : memref<8x128xf32, #tpu.memory_space<vmem>>, vector<8x128xf32>,
      %cst_33 = arith.constant 0xFF800000 : f32
      %41 = vector.broadcast %cst_33 : f32 to vector<8x1xf32>
      %c0_34 = arith.constant 0 : index
      %c0_35 = arith.constant 0 : index
      %42 = vector.load %arg9[%c0_34, %c0_35] : memref<8x1xf32, #tpu.memory_space<vmem>>, vector<8x1xf32>
      tpu.vector_store %arg9[%c0_34, %c0_35], %41 {strides = array<i32>} : memref<8x1xf32, #tpu.memory_space<vmem>>, vector<8x1xf32>,
      %cst_36 = arith.constant 0.000000e+00 : f32
      %43 = vector.broadcast %cst_36 : f32 to vector<8x1xf32>
      %c0_37 = arith.constant 0 : index
      %c0_38 = arith.constant 0 : index
      %44 = vector.load %arg10[%c0_37, %c0_38] : memref<8x1xf32, #tpu.memory_space<vmem>>, vector<8x1xf32>
      tpu.vector_store %arg10[%c0_37, %c0_38], %43 {strides = array<i32>} : memref<8x1xf32, #tpu.memory_space<vmem>>, vector<8x1xf32>,
      %cst_39 = arith.constant 0.000000e+00 : f32
      %45 = vector.broadcast %cst_39 : f32 to vector<8x128xf32>
      %c0_40 = arith.constant 0 : index
      %c0_41 = arith.constant 0 : index
      %46 = vector.load %arg11[%c0_40, %c0_41] : memref<8x128xf32, #tpu.memory_space<vmem>>, vector<8x128xf32>
      tpu.vector_store %arg11[%c0_40, %c0_41], %45 {strides = array<i32>} : memref<8x128xf32, #tpu.memory_space<vmem>>, vector<8x128xf32>,
    } else {
    }
    %c0 = arith.constant 0 : index
    %c0_1 = arith.constant 0 : index
    %c0_2 = arith.constant 0 : index
    %3 = vector.load %arg4[%c0, %c0_1, %c0_2] : memref<1x8x128xf32, #tpu.memory_space<vmem>>, vector<1x8x128xf32>
    %4 = vector.shape_cast %3 : vector<1x8x128xf32> to vector<8x128xf32>
    %c0_3 = arith.constant 0 : index
    %c0_4 = arith.constant 0 : index
    %5 = vector.load %arg6[%c0_3, %c0_4] : memref<128x256xf32, #tpu.memory_space<vmem>>, vector<128x256xf32>
    %cst = arith.constant dense<0.000000e+00> : vector<8x256xf32>
    %6 = tpu.matmul %4, %5, %cst {dimension_numbers = #tpu.dot_dimension_numbers<[1], [0], [0], [1], [0, 0, 1, 1], [], []>} : vector<8x128xf32>, vector<128x256xf32>, vector<8x256xf32> -> vector<8x256xf32>
    %7 = vector.extract_strided_slice %6 {offsets = [0, 0], sizes = [8, 128], strides = [1, 1]} : vector<8x256xf32> to vector<8x128xf32>
    %8 = vector.extract_strided_slice %6 {offsets = [0, 128], sizes = [8, 128], strides = [1, 1]} : vector<8x256xf32> to vector<8x128xf32>
    %c0_5 = arith.constant 0 : index
    %c0_6 = arith.constant 0 : index
    %9 = vector.load %arg8[%c0_5, %c0_6] : memref<8x128xf32, #tpu.memory_space<vmem>>, vector<8x128xf32>
    %cst_7 = arith.constant dense<0.000000e+00> : vector<8x8xf32>
    %10 = tpu.matmul %9, %7, %cst_7 {dimension_numbers = #tpu.dot_dimension_numbers<[1], [1], [0], [0], [0, 0, 1, 0], [], []>} : vector<8x128xf32>, vector<8x128xf32>, vector<8x8xf32> -> vector<8x8xf32>
    %c0_8 = arith.constant 0 : index
    %c0_9 = arith.constant 0 : index
    %11 = vector.load %arg9[%c0_8, %c0_9] : memref<8x1xf32, #tpu.memory_space<vmem>>, vector<8x1xf32>
    %cst_10 = arith.constant dense<0xFF800000> : vector<8xf32>
    %12 = vector.multi_reduction <maximumf>, %10, %cst_10 [1] : vector<8x8xf32> to vector<8xf32>
    %13 = vector.shape_cast %12 : vector<8xf32> to vector<8x1xf32>
    %14 = arith.maximumf %11, %13 : vector<8x1xf32>
    %15 = arith.subf %11, %14 : vector<8x1xf32>
    %16 = math.exp %15 : vector<8x1xf32>
    %17 = vector.broadcast %14 : vector<8x1xf32> to vector<8x8xf32>
    %18 = arith.subf %10, %17 : vector<8x8xf32>
    %19 = math.exp %18 : vector<8x8xf32>
    %c0_11 = arith.constant 0 : index
    %c0_12 = arith.constant 0 : index
    %20 = vector.load %arg10[%c0_11, %c0_12] : memref<8x1xf32, #tpu.memory_space<vmem>>, vector<8x1xf32>
    %21 = arith.mulf %16, %20 : vector<8x1xf32>
    %cst_13 = arith.constant dense<0.000000e+00> : vector<8xf32>
    %22 = vector.multi_reduction <add>, %19, %cst_13 [1] : vector<8x8xf32> to vector<8xf32>
    %23 = vector.shape_cast %22 : vector<8xf32> to vector<8x1xf32>
    %24 = arith.addf %21, %23 : vector<8x1xf32>
    %c0_14 = arith.constant 0 : index
    %c0_15 = arith.constant 0 : index
    %25 = vector.load %arg10[%c0_14, %c0_15] : memref<8x1xf32, #tpu.memory_space<vmem>>, vector<8x1xf32>
    tpu.vector_store %arg10[%c0_14, %c0_15], %24 {strides = array<i32>} : memref<8x1xf32, #tpu.memory_space<vmem>>, vector<8x1xf32>,
    %c0_16 = arith.constant 0 : index
    %c0_17 = arith.constant 0 : index
    %26 = vector.load %arg11[%c0_16, %c0_17] : memref<8x128xf32, #tpu.memory_space<vmem>>, vector<8x128xf32>
    %27 = vector.broadcast %16 : vector<8x1xf32> to vector<8x128xf32>
    %28 = arith.mulf %27, %26 : vector<8x128xf32>
    %cst_18 = arith.constant dense<0.000000e+00> : vector<8x128xf32>
    %29 = tpu.matmul %19, %8, %cst_18 {dimension_numbers = #tpu.dot_dimension_numbers<[1], [0], [0], [1], [0, 0, 1, 1], [], []>} : vector<8x8xf32>, vector<8x128xf32>, vector<8x128xf32> -> vector<8x128xf32>
    %30 = arith.addf %28, %29 : vector<8x128xf32>
    %c0_19 = arith.constant 0 : index
    %c0_20 = arith.constant 0 : index
    %31 = vector.load %arg11[%c0_19, %c0_20] : memref<8x128xf32, #tpu.memory_space<vmem>>, vector<8x128xf32>
    tpu.vector_store %arg11[%c0_19, %c0_20], %30 {strides = array<i32>} : memref<8x128xf32, #tpu.memory_space<vmem>>, vector<8x128xf32>,
    %c0_21 = arith.constant 0 : index
    %c0_22 = arith.constant 0 : index
    %32 = vector.load %arg9[%c0_21, %c0_22] : memref<8x1xf32, #tpu.memory_space<vmem>>, vector<8x1xf32>
    tpu.vector_store %arg9[%c0_21, %c0_22], %14 {strides = array<i32>} : memref<8x1xf32, #tpu.memory_space<vmem>>, vector<8x1xf32>,
    %c0_i32_23 = arith.constant 0 : i32
    %33 = arith.cmpi eq, %arg2, %c0_i32_23 : i32
    %34 = arith.extui %33 : i1 to i32
    %c0_i32_24 = arith.constant 0 : i32
    %35 = arith.cmpi ne, %34, %c0_i32_24 : i32
    scf.if %35 {
      %c0_25 = arith.constant 0 : index
      %c0_26 = arith.constant 0 : index
      %36 = vector.load %arg10[%c0_25, %c0_26] : memref<8x1xf32, #tpu.memory_space<vmem>>, vector<8x1xf32>
      %37 = tpu.reciprocal %36 {approx = true} : vector<8x1xf32> -> vector<8x1xf32>
      %c0_27 = arith.constant 0 : index
      %c0_28 = arith.constant 0 : index
      %38 = vector.load %arg11[%c0_27, %c0_28] : memref<8x128xf32, #tpu.memory_space<vmem>>, vector<8x128xf32>
      %39 = vector.broadcast %37 : vector<8x1xf32> to vector<8x128xf32>
      %40 = arith.mulf %38, %39 : vector<8x128xf32>
      %c0_29 = arith.constant 0 : index
      %c0_30 = arith.constant 0 : index
      %c0_31 = arith.constant 0 : index
      %41 = vector.load %arg7[%c0_29, %c0_30, %c0_31] : memref<1x8x128xf32, #tpu.memory_space<vmem>>, vector<1x8x128xf32>
      %42 = vector.shape_cast %41 : vector<1x8x128xf32> to vector<8x128xf32>
      %43 = vector.shape_cast %40 : vector<8x128xf32> to vector<1x8x128xf32>
      tpu.vector_store %arg7[%c0_29, %c0_30, %c0_31], %43 {strides = array<i32>} : memref<1x8x128xf32, #tpu.memory_space<vmem>>, vector<1x8x128xf32>,
    } else {
    }
    return
  }
  func.func @transform_0(%arg0: i32, %arg1: i32, %arg2: i32) -> (i32, i32, i32) {
    %c0_i32 = arith.constant 0 : i32
    %c0_i32_0 = arith.constant 0 : i32
    return %arg0, %arg1, %c0_i32 : i32, i32, i32
  }
  func.func @transform_1(%arg0: i32, %arg1: i32, %arg2: i32) -> (i32, i32, i32) {
    %c0_i32 = arith.constant 0 : i32
    %c0_i32_0 = arith.constant 0 : i32
    return %arg0, %arg2, %c0_i32 : i32, i32, i32
  }
  func.func @transform_2(%arg0: i32, %arg1: i32, %arg2: i32) -> (i32, i32) {
    %c0_i32 = arith.constant 0 : i32
    %c0_i32_0 = arith.constant 0 : i32
    %c0_i32_1 = arith.constant 0 : i32
    return %c0_i32, %c0_i32_0 : i32, i32
  }
  func.func @transform_3(%arg0: i32, %arg1: i32, %arg2: i32) -> (i32, i32) {
    %c0_i32 = arith.constant 0 : i32
    %c0_i32_0 = arith.constant 0 : i32
    %c0_i32_1 = arith.constant 0 : i32
    return %c0_i32, %c0_i32_0 : i32, i32
  }
  func.func @transform_4(%arg0: i32, %arg1: i32, %arg2: i32) -> (i32, i32, i32) {
    %c0_i32 = arith.constant 0 : i32
    %c0_i32_0 = arith.constant 0 : i32
    return %arg0, %arg1, %c0_i32 : i32, i32, i32
  }
}

</mosaic_0001>

<llo_original>
// kernel: basic_attention.1
$region0: #{basic_attention.1}
  #allocation0 [shape = 'u32[]', space=smem, size = 0x4, offset = 0x4, fixed_abs, tag = 'smem constant byte address 0x4 - core index']
  #allocation1 [shape = 'u32[144,128]{1,0:T(1,128)}', space=vmem, size = 0x12000, scoped, tag = 'internal scratch']
  #allocation2 [shape = 'f32[8,128]{1,0:T(8,128)}', space=vmem, size = 0x1000, scoped, tag = 'scratch operand']
  #allocation3 [shape = 'f32[8,1]{1,0:T(8,128)}', space=vmem, size = 0x1000, scoped, tag = 'scratch operand']
  #allocation4 [shape = 'f32[8,1]{1,0:T(8,128)}', space=vmem, size = 0x1000, scoped, tag = 'scratch operand']
  #allocation5 [shape = 'f32[8,128]{1,0:T(8,128)}', space=vmem, size = 0x1000, scoped, tag = 'scratch operand']
  %s0 = inlined_call_operand.vmem [shape: f32[2,8,128], index: 0, kind: input, shape index: {}, may-alias: {0,1}]
  %s1 = inlined_call_operand.vmem [shape: f32[2,8,128], index: 1, kind: input, shape index: {}, may-alias: {0,1}]
  %s2 = inlined_call_operand.vmem [shape: f32[128,128], index: 2, kind: input, shape index: {}]
  %s3 = inlined_call_operand.vmem [shape: f32[128,256], index: 3, kind: input, shape index: {}]
  %s4 = inlined_call_operand.hbm [shape: f32[2,8,128], index: 4, kind: output, shape index: {}]
  %s5 = sld [smem:[#allocation0]]
  $region57: #{basic_attention.1} parent=0
    _
  %s7 = ssub.s32 1, %s5
  %s8 = scalar_select 0, %s7, %s5
  $region1: #{basic_attention.1} parent=0
    #allocation6 [shape = 'u8[8192]{0}', space=vmem, size = 0x2000, scoped, tag = 'output window, operand 0']
    #allocation7 [shape = 's32[2]{0}', space=sflag, size = 0x8, scoped, tag = 'scoped memory for basic_attention.1']
    %9 = vsyncpa [#allocation7], 0
    %s10 = scalar_lea.sflag [#allocation7], 1
    %11 = vsyncpa %s10, 0
    loop: start=0, step=1, limit=4
    $region2: #{basic_attention.1} parent=1 // loop_pre_header
      _
    $region3: #{basic_attention.1} parent=1 // loop_header
      %s13 = sphi 0, %s17
      %p14 = scmp.ge.s32.totalorder %s13, 4
      %s20 = sphi 0, %s39
      %s21 = sphi 0, %s35
      %s22 = sphi 0, %s31
      %s23 = sphi 0, %s20
      %s24 = sphi 0, %s21
      %s25 = sphi 0, %s22
      %s26 = sphi 0, %s23
      %s27 = sphi 0, %s24
      %s28 = sphi 0, %s25
      %s44 = sphi 0, %s46
      %s47 = sphi 0, %s44
      %s48 = sphi 0, %s47
      %s64 = sphi 0, %s48
      %s72 = sphi 0, %s74
      %s75 = sphi 0, %s72
      %s76 = sphi 0, %s75
      %s92 = sphi 0, %s76
      %s96 = sphi 0, %s96
      %s98 = sphi 0, %s96
      %s99 = sphi 0, %s98
      %s113 = sphi 0, %s99
      %s117 = sphi 0, %s117
      %s119 = sphi 0, %s117
      %s120 = sphi 0, %s119
      %s134 = sphi 0, %s120
      %s142 = sphi 0, %s144
      %s145 = sphi 0, %s142
      %s146 = sphi 0, %s145
      %s162 = sphi 0, %s146
    $region4: #{basic_attention.1} parent=1 // loop_header_branch
      %16 = sbr.rel (%p14) target = $region8
    $region5: #{basic_attention.1} parent=1 // loop_body
      %s18 = ssub.s32 %s13, 1
      %s19 = ssub.s32 %s13, 2
      %s29 = sadd.s32 1, %s22
      %p30 = scmp.ge.s32.totalorder %s29, 1
      %s31 = scalar_select %p30, 0, %s29
      %s32 = sadd.s32 1, %s21
      %s33 = scalar_select %p30, %s32, %s21
      %p34 = scmp.ge.s32.totalorder %s33, 1
      %s35 = scalar_select %p34, 0, %s33
      %s36 = sadd.s32 1, %s20
      %s37 = scalar_select %p34, %s36, %s20
      %p38 = scmp.ge.s32.totalorder %s37, 2
      %s39 = scalar_select %p38, 0, %s37
      %s40 = ssub.s32 %s20, %s39
      %s41 = ssub.s32 %s21, %s35
      %s42 = sor.u32 %s40, %s41
      %p43 = scmp.eq.s32.totalorder %s42, 0
      %s45 = sadd.s32 %s44, 1
      %s46 = scalar_select %p43, %s44, %s45
      %p49 = pneg %p43
      %p50 = scmp.eq.s32.totalorder %s13, 1
      %p51 = por %p49, %p50
      %p52 = scmp.ne.s32.totalorder %s44, %s47
      %p53 = scmp.eq.s32.totalorder %s13, 0
      %p54 = por %p52, %p53
      %p55 = scmp.ne.s32.totalorder %s44, %s47
      %p56 = scmp.eq.s32.totalorder %s18, 1
      %p57 = por %p55, %p56
      %p58 = scmp.ne.s32.totalorder %s47, %s48
      %p59 = scmp.eq.s32.totalorder %s18, 0
      %p60 = por %p58, %p59
      %p61 = scmp.ne.s32.totalorder %s47, %s48
      %p62 = scmp.eq.s32.totalorder %s19, 1
      %p63 = por %p61, %p62
      %p65 = scmp.ne.s32.totalorder %s48, %s64
      %p66 = scmp.eq.s32.totalorder %s19, 0
      %p67 = por %p65, %p66
      %s68 = ssub.s32 %s20, %s39
      %s69 = ssub.s32 %s22, %s31
      %s70 = sor.u32 %s68, %s69
      %p71 = scmp.eq.s32.totalorder %s70, 0
      %s73 = sadd.s32 %s72, 1
      %s74 = scalar_select %p71, %s72, %s73
      %p77 = pneg %p71
      %p78 = scmp.eq.s32.totalorder %s13, 1
      %p79 = por %p77, %p78
      %p80 = scmp.ne.s32.totalorder %s72, %s75
      %p81 = scmp.eq.s32.totalorder %s13, 0
      %p82 = por %p80, %p81
      %p83 = scmp.ne.s32.totalorder %s72, %s75
      %p84 = scmp.eq.s32.totalorder %s18, 1
      %p85 = por %p83, %p84
      %p86 = scmp.ne.s32.totalorder %s75, %s76
      %p87 = scmp.eq.s32.totalorder %s18, 0
      %p88 = por %p86, %p87
      %p89 = scmp.ne.s32.totalorder %s75, %s76
      %p90 = scmp.eq.s32.totalorder %s19, 1
      %p91 = por %p89, %p90
      %p93 = scmp.ne.s32.totalorder %s76, %s92
      %p94 = scmp.eq.s32.totalorder %s19, 0
      %p95 = por %p93, %p94
      %s97 = sadd.s32 %s96, 1
      %p100 = scmp.eq.s32.totalorder %s13, 1
      %p101 = scmp.ne.s32.totalorder %s96, %s98
      %p102 = scmp.eq.s32.totalorder %s13, 0
      %p103 = por %p101, %p102
      %p104 = scmp.ne.s32.totalorder %s96, %s98
      %p105 = scmp.eq.s32.totalorder %s18, 1
      %p106 = por %p104, %p105
      %p107 = scmp.ne.s32.totalorder %s98, %s99
      %p108 = scmp.eq.s32.totalorder %s18, 0
      %p109 = por %p107, %p108
      %p110 = scmp.ne.s32.totalorder %s98, %s99
      %p111 = scmp.eq.s32.totalorder %s19, 1
      %p112 = por %p110, %p111
      %p114 = scmp.ne.s32.totalorder %s99, %s113
      %p115 = scmp.eq.s32.totalorder %s19, 0
      %p116 = por %p114, %p115
      %s118 = sadd.s32 %s117, 1
      %p121 = scmp.eq.s32.totalorder %s13, 1
      %p122 = scmp.ne.s32.totalorder %s117, %s119
      %p123 = scmp.eq.s32.totalorder %s13, 0
      %p124 = por %p122, %p123
      %p125 = scmp.ne.s32.totalorder %s117, %s119
      %p126 = scmp.eq.s32.totalorder %s18, 1
      %p127 = por %p125, %p126
      %p128 = scmp.ne.s32.totalorder %s119, %s120
      %p129 = scmp.eq.s32.totalorder %s18, 0
      %p130 = por %p128, %p129
      %p131 = scmp.ne.s32.totalorder %s119, %s120
      %p132 = scmp.eq.s32.totalorder %s19, 1
      %p133 = por %p131, %p132
      %p135 = scmp.ne.s32.totalorder %s120, %s134
      %p136 = scmp.eq.s32.totalorder %s19, 0
      %p137 = por %p135, %p136
      %s138 = ssub.s32 %s20, %s39
      %s139 = ssub.s32 %s21, %s35
      %s140 = sor.u32 %s138, %s139
      %p141 = scmp.eq.s32.totalorder %s140, 0
      %s143 = sadd.s32 %s142, 1
      %s144 = scalar_select %p141, %s142, %s143
      %p147 = pneg %p141
      %p148 = scmp.eq.s32.totalorder %s13, 1
      %p149 = por %p147, %p148
      %p150 = scmp.ne.s32.totalorder %s142, %s145
      %p151 = scmp.eq.s32.totalorder %s13, 0
      %p152 = por %p150, %p151
      %p153 = scmp.ne.s32.totalorder %s142, %s145
      %p154 = scmp.eq.s32.totalorder %s18, 1
      %p155 = por %p153, %p154
      %p156 = scmp.ne.s32.totalorder %s145, %s146
      %p157 = scmp.eq.s32.totalorder %s18, 0
      %p158 = por %p156, %p157
      %p159 = scmp.ne.s32.totalorder %s145, %s146
      %p160 = scmp.eq.s32.totalorder %s19, 1
      %p161 = por %p159, %p160
      %p163 = scmp.ne.s32.totalorder %s146, %s162
      %p164 = scmp.eq.s32.totalorder %s19, 0
      %p165 = por %p163, %p164
      %p166 = scmp.le.s32.totalorder 1, %s13
      %p167 = scmp.lt.s32.totalorder %s13, 3
      %p168 = pnand %p166, %p167
      %p169 = pneg %p168
      // Predicated region
      $region9: #{basic_attention.1} parent=5 // pred_check
        _
      $region10: #{basic_attention.1} parent=5 // pred_check_branch
        %171 = sbr.rel (%p168) target = $region12
      $region11: #{basic_attention.1} parent=5 // pred_region
        %s172 = ssub.s32 %s13, 1
        // Predicated region
        $region13: #{basic_attention.1} parent=11 // pred_check
          %p173 = pneg %p109
        $region14: #{basic_attention.1} parent=11 // pred_check_branch
          %175 = sbr.rel (%p173) target = $region16
        $region15: #{basic_attention.1} parent=11 // pred_region
          _
        $region16: #{basic_attention.1} parent=11 // pred_fallthru
          _
        // Predicated region
        $region17: #{basic_attention.1} parent=11 // pred_check
          %p176 = pneg %p130
        $region18: #{basic_attention.1} parent=11 // pred_check_branch
          %178 = sbr.rel (%p176) target = $region20
        $region19: #{basic_attention.1} parent=11 // pred_region
          _
        $region20: #{basic_attention.1} parent=11 // pred_fallthru
          _
      $region12: #{basic_attention.1} parent=5 // pred_fallthru
        _
      %p179 = scmp.lt.s32.totalorder %s13, 2
      // Predicated region
      $region21: #{basic_attention.1} parent=5 // pred_check
        %p180 = pneg %p179
      $region22: #{basic_attention.1} parent=5 // pred_check_branch
        %182 = sbr.rel (%p180) target = $region24
      $region23: #{basic_attention.1} parent=5 // pred_region
        // Predicated region
        $region25: #{basic_attention.1} parent=23 // pred_check
          %p183 = pneg %p54
        $region26: #{basic_attention.1} parent=23 // pred_check_branch
          %185 = sbr.rel (%p183) target = $region28
        $region27: #{basic_attention.1} parent=23 // pred_region
          %p186 = scmp.lt.s32.totalorder %s20, 1
          %s187 = scalar_select %p186, %s20, 1
          %p188 = scmp.lt.s32.totalorder %s21, 0
          %s189 = scalar_select %p188, %s21, 0
          %s190 = sadd.s32 %s189, %s187
          %s191 = smul.addr %s190, 8
          %s192 = scalar_lea.vmem %s0, %s191
        $region28: #{basic_attention.1} parent=23 // pred_fallthru
          _
        // Predicated region
        $region29: #{basic_attention.1} parent=23 // pred_check
          %p193 = pneg %p82
        $region30: #{basic_attention.1} parent=23 // pred_check_branch
          %195 = sbr.rel (%p193) target = $region32
        $region31: #{basic_attention.1} parent=23 // pred_region
          %p196 = scmp.lt.s32.totalorder %s20, 1
          %s197 = scalar_select %p196, %s20, 1
          %p198 = scmp.lt.s32.totalorder %s22, 0
          %s199 = scalar_select %p198, %s22, 0
          %s200 = sadd.s32 %s199, %s197
          %s201 = smul.addr %s200, 8
          %s202 = scalar_lea.vmem %s1, %s201
        $region32: #{basic_attention.1} parent=23 // pred_fallthru
          _
      $region24: #{basic_attention.1} parent=5 // pred_fallthru
        _
      %p203 = scmp.le.s32.totalorder 1, %s13
      %p204 = scmp.lt.s32.totalorder %s13, 3
      %p205 = pnand %p203, %p204
      %p206 = pneg %p205
      // Predicated region
      $region33: #{basic_attention.1} parent=5 // pred_check
        _
      $region34: #{basic_attention.1} parent=5 // pred_check_branch
        %208 = sbr.rel (%p205) target = $region36
      $region35: #{basic_attention.1} parent=5 // pred_region
        %s209 = ssub.s32 %s13, 1
        %p210 = scmp.lt.s32.totalorder %s23, 1
        %s211 = scalar_select %p210, %s23, 1
        %p212 = scmp.lt.s32.totalorder %s24, 0
        %s213 = scalar_select %p212, %s24, 0
        %s214 = sadd.s32 %s213, %s211
        %s215 = smul.addr %s214, 8
        %s216 = scalar_lea.vmem %s0, %s215
        %p217 = pneg %p60
        %p218 = pneg %p57
        %p219 = scmp.lt.s32.totalorder %s23, 1
        %s220 = scalar_select %p219, %s23, 1
        %p221 = scmp.lt.s32.totalorder %s25, 0
        %s222 = scalar_select %p221, %s25, 0
        %s223 = sadd.s32 %s222, %s220
        %s224 = smul.addr %s223, 8
        %s225 = scalar_lea.vmem %s1, %s224
        %p226 = pneg %p88
        %p227 = pneg %p85
        %p228 = pneg %p109
        %p229 = pneg %p106
        %p230 = pneg %p130
        %p231 = pneg %p127
        %p232 = pneg %p158
        %p233 = pneg %p155
        %s234 = sand.u32 %s145, 1
        %s235 = scalar_lea.sflag [#allocation7], %s234
        %s236 = sand.u32 %s145, 1
        %s237 = smul.addr %s236, 8
        %s238 = scalar_lea.vmem [#allocation6], %s237
        %p239 = scmp.lt.s32.totalorder %s23, 1
        %s240 = scalar_select %p239, %s23, 1
        %p241 = scmp.lt.s32.totalorder %s24, 0
        %s242 = scalar_select %p241, %s24, 0
        %s243 = sadd.s32 %s242, %s240
        %s244 = smul.addr %s243, 8
        %s245 = scalar_lea.vmem %s0, %s244
        %p246 = scmp.lt.s32.totalorder %s23, 1
        %s247 = scalar_select %p246, %s23, 1
        %p248 = scmp.lt.s32.totalorder %s25, 0
        %s249 = scalar_select %p248, %s25, 0
        %s250 = sadd.s32 %s249, %s247
        %s251 = smul.addr %s250, 8
        %s252 = scalar_lea.vmem %s1, %s251
        %p253 = scmp.eq.s32.totalorder %s25, 0
        // Predicated region
        $region37: #{basic_attention.1} parent=35 // pred_check
          %p254 = pneg %p253
        $region38: #{basic_attention.1} parent=35 // pred_check_branch
          %256 = sbr.rel (%p254) target = $region40
        $region39: #{basic_attention.1} parent=35 // pred_region
          %v257 = vld [vmem:[%s245] sm:$0xff]
          %v258 = vld [vmem:[%s2] sm:$0xff]
          %v259 = vld [vmem:[%s2 + $0x8] sm:$0xff]
          %v260 = vld [vmem:[%s2 + $0x10] sm:$0xff]
          %v261 = vld [vmem:[%s2 + $0x18] sm:$0xff]
          %v262 = vld [vmem:[%s2 + $0x20] sm:$0xff]
          %v263 = vld [vmem:[%s2 + $0x28] sm:$0xff]
          %v264 = vld [vmem:[%s2 + $0x30] sm:$0xff]
          %v265 = vld [vmem:[%s2 + $0x38] sm:$0xff]
          %v266 = vld [vmem:[%s2 + $0x40] sm:$0xff]
          %v267 = vld [vmem:[%s2 + $0x48] sm:$0xff]
          %v268 = vld [vmem:[%s2 + $0x50] sm:$0xff]
          %v269 = vld [vmem:[%s2 + $0x58] sm:$0xff]
          %v270 = vld [vmem:[%s2 + $0x60] sm:$0xff]
          %v271 = vld [vmem:[%s2 + $0x68] sm:$0xff]
          %v272 = vld [vmem:[%s2 + $0x70] sm:$0xff]
          %v273 = vld [vmem:[%s2 + $0x78] sm:$0xff]
          %274 = vmatprep.subr.mxu0 0.0
          %275 = vmatpush1.msra.mxu0 %v258
          %276 = vmatprep.subr.mxu0 0.0
          %277 = vmatpush1.msra.mxu0 %v259
          %278 = vmatprep.subr.mxu0 0.0
          %279 = vmatpush1.msra.mxu0 %v260
          %280 = vmatprep.subr.mxu0 0.0
          %281 = vmatpush1.msra.mxu0 %v261
          %282 = vmatprep.subr.mxu0 0.0
          %283 = vmatpush1.msra.mxu0 %v262
          %284 = vmatprep.subr.mxu0 0.0
          %285 = vmatpush1.msra.mxu0 %v263
          %286 = vmatprep.subr.mxu0 0.0
          %287 = vmatpush1.msra.mxu0 %v264
          %288 = vmatprep.subr.mxu0 0.0
          %289 = vmatpush1.msra.mxu0 %v265
          %290 = vmatprep.subr.mxu0 0.0
          %291 = vmatpush1.msra.mxu0 %v266
          %292 = vmatprep.subr.mxu0 0.0
          %293 = vmatpush1.msra.mxu0 %v267
          %294 = vmatprep.subr.mxu0 0.0
          %295 = vmatpush1.msra.mxu0 %v268
          %296 = vmatprep.subr.mxu0 0.0
          %297 = vmatpush1.msra.mxu0 %v269
          %298 = vmatprep.subr.mxu0 0.0
          %299 = vmatpush1.msra.mxu0 %v270
          %300 = vmatprep.subr.mxu0 0.0
          %301 = vmatpush1.msra.mxu0 %v271
          %302 = vmatprep.subr.mxu0 0.0
          %303 = vmatpush1.msra.mxu0 %v272
          %304 = vmatprep.subr.mxu0 0.0
          %305 = vmatpush1.msra.mxu0 %v273
          %306 = vmatprep.subr.mxu0 0.0
          %307 = vmatpush1.msra.mxu0 0.0
          %308 = vmatprep.subr.mxu0 0.0
          %309 = vmatpush1.msra.mxu0 0.0
          %310 = vmatprep.subr.mxu0 0.0
          %311 = vmatpush1.msra.mxu0 0.0
          %312 = vmatprep.subr.mxu0 0.0
          %313 = vmatpush1.msra.mxu0 0.0
          %314 = vmatprep.subr.mxu0 0.0
          %315 = vmatpush1.msra.mxu0 0.0
          %316 = vmatprep.subr.mxu0 0.0
          %317 = vmatpush1.msra.mxu0 0.0
          %318 = vmatprep.subr.mxu0 0.0
          %319 = vmatpush1.msra.mxu0 0.0
          %320 = vmatprep.subr.mxu0 0.0
          %321 = vmatpush1.msra.mxu0 0.0
          %322 = vmatprep.subr.mxu0 0.0
          %323 = vmatpush1.msra.mxu0 0.0
          %324 = vmatprep.subr.mxu0 0.0
          %325 = vmatpush1.msra.mxu0 0.0
          %326 = vmatprep.subr.mxu0 0.0
          %327 = vmatpush1.msra.mxu0 0.0
          %328 = vmatprep.subr.mxu0 0.0
          %329 = vmatpush1.msra.mxu0 0.0
          %330 = vmatprep.subr.mxu0 0.0
          %331 = vmatpush1.msra.mxu0 0.0
          %332 = vmatprep.subr.mxu0 0.0
          %333 = vmatpush1.msra.mxu0 0.0
          %334 = vmatprep.subr.mxu0 0.0
          %335 = vmatpush1.msra.mxu0 0.0
          %336 = vmatprep.subr.mxu0 0.0
          %337 = vmatpush1.msra.mxu0 0.0
          %338 = vmatprep.mubr.f32.mxu0 0.0
          %339 = vmatmul.mubr.f32.gmra.mrb[0].mxu0 %v257
          %v340 = vpop.f32.mrb[0].mxu0
          %v341 = vadd.f32 0.0, %v340
          %v342 = vpop.f32.mrb[0].mxu0
          %343 = vdwg.mxu0
          %344 = vst [vmem:[#allocation2] sm:$0xff] %v341
          %vm345 = vcmask 7168
          %346 = vst.msk [vmem:[#allocation3] sm:$0xff] %vm345, -inf
          %347 = vst.msk [vmem:[#allocation4] sm:$0xff] %vm345, 0.0
          %348 = vst [vmem:[#allocation5] sm:$0xff] 0.0
        $region40: #{basic_attention.1} parent=35 // pred_fallthru
          _
        %v349 = vld [vmem:[%s252] sm:$0xff]
        %v350 = vld [vmem:[%s3] sm:$0xff]
        %v351 = vld [vmem:[%s3 + $0x8] sm:$0xff]
        %v352 = vld [vmem:[%s3 + $0x10] sm:$0xff]
        %v353 = vld [vmem:[%s3 + $0x18] sm:$0xff]
        %v354 = vld [vmem:[%s3 + $0x20] sm:$0xff]
        %v355 = vld [vmem:[%s3 + $0x28] sm:$0xff]
        %v356 = vld [vmem:[%s3 + $0x30] sm:$0xff]
        %v357 = vld [vmem:[%s3 + $0x38] sm:$0xff]
        %v358 = vld [vmem:[%s3 + $0x40] sm:$0xff]
        %v359 = vld [vmem:[%s3 + $0x48] sm:$0xff]
        %v360 = vld [vmem:[%s3 + $0x50] sm:$0xff]
        %v361 = vld [vmem:[%s3 + $0x58] sm:$0xff]
        %v362 = vld [vmem:[%s3 + $0x60] sm:$0xff]
        %v363 = vld [vmem:[%s3 + $0x68] sm:$0xff]
        %v364 = vld [vmem:[%s3 + $0x70] sm:$0xff]
        %v365 = vld [vmem:[%s3 + $0x78] sm:$0xff]
        %v366 = vld [vmem:[%s3 + $0x80] sm:$0xff]
        %v367 = vld [vmem:[%s3 + $0x88] sm:$0xff]
        %v368 = vld [vmem:[%s3 + $0x90] sm:$0xff]
        %v369 = vld [vmem:[%s3 + $0x98] sm:$0xff]
        %v370 = vld [vmem:[%s3 + $0xa0] sm:$0xff]
        %v371 = vld [vmem:[%s3 + $0xa8] sm:$0xff]
        %v372 = vld [vmem:[%s3 + $0xb0] sm:$0xff]
        %v373 = vld [vmem:[%s3 + $0xb8] sm:$0xff]
        %v374 = vld [vmem:[%s3 + $0xc0] sm:$0xff]
        %v375 = vld [vmem:[%s3 + $0xc8] sm:$0xff]
        %v376 = vld [vmem:[%s3 + $0xd0] sm:$0xff]
        %v377 = vld [vmem:[%s3 + $0xd8] sm:$0xff]
        %v378 = vld [vmem:[%s3 + $0xe0] sm:$0xff]
        %v379 = vld [vmem:[%s3 + $0xe8] sm:$0xff]
        %v380 = vld [vmem:[%s3 + $0xf0] sm:$0xff]
        %v381 = vld [vmem:[%s3 + $0xf8] sm:$0xff]
        %382 = vmatprep.subr.mxu0 %v351
        %383 = vmatpush1.msra.mxu0 %v350
        %384 = vmatprep.subr.mxu0 %v353
        %385 = vmatpush1.msra.mxu0 %v352
        %386 = vmatprep.subr.mxu0 %v355
        %387 = vmatpush1.msra.mxu0 %v354
        %388 = vmatprep.subr.mxu0 %v357
        %389 = vmatpush1.msra.mxu0 %v356
        %390 = vmatprep.subr.mxu0 %v359
        %391 = vmatpush1.msra.mxu0 %v358
        %392 = vmatprep.subr.mxu0 %v361
        %393 = vmatpush1.msra.mxu0 %v360
        %394 = vmatprep.subr.mxu0 %v363
        %395 = vmatpush1.msra.mxu0 %v362
        %396 = vmatprep.subr.mxu0 %v365
        %397 = vmatpush1.msra.mxu0 %v364
        %398 = vmatprep.subr.mxu0 %v367
        %399 = vmatpush1.msra.mxu0 %v366
        %400 = vmatprep.subr.mxu0 %v369
        %401 = vmatpush1.msra.mxu0 %v368
        %402 = vmatprep.subr.mxu0 %v371
        %403 = vmatpush1.msra.mxu0 %v370
        %404 = vmatprep.subr.mxu0 %v373
        %405 = vmatpush1.msra.mxu0 %v372
        %406 = vmatprep.subr.mxu0 %v375
        %407 = vmatpush1.msra.mxu0 %v374
        %408 = vmatprep.subr.mxu0 %v377
        %409 = vmatpush1.msra.mxu0 %v376
        %410 = vmatprep.subr.mxu0 %v379
        %411 = vmatpush1.msra.mxu0 %v378
        %412 = vmatprep.subr.mxu0 %v381
        %413 = vmatpush1.msra.mxu0 %v380
        %414 = vmatprep.subr.mxu0 0.0
        %415 = vmatpush1.msra.mxu0 0.0
        %416 = vmatprep.subr.mxu0 0.0
        %417 = vmatpush1.msra.mxu0 0.0
        %418 = vmatprep.subr.mxu0 0.0
        %419 = vmatpush1.msra.mxu0 0.0
        %420 = vmatprep.subr.mxu0 0.0
        %421 = vmatpush1.msra.mxu0 0.0
        %422 = vmatprep.subr.mxu0 0.0
        %423 = vmatpush1.msra.mxu0 0.0
        %424 = vmatprep.subr.mxu0 0.0
        %425 = vmatpush1.msra.mxu0 0.0
        %426 = vmatprep.subr.mxu0 0.0
        %427 = vmatpush1.msra.mxu0 0.0
        %428 = vmatprep.subr.mxu0 0.0
        %429 = vmatpush1.msra.mxu0 0.0
        %430 = vmatprep.subr.mxu0 0.0
        %431 = vmatpush1.msra.mxu0 0.0
        %432 = vmatprep.subr.mxu0 0.0
        %433 = vmatpush1.msra.mxu0 0.0
        %434 = vmatprep.subr.mxu0 0.0
        %435 = vmatpush1.msra.mxu0 0.0
        %436 = vmatprep.subr.mxu0 0.0
        %437 = vmatpush1.msra.mxu0 0.0
        %438 = vmatprep.subr.mxu0 0.0
        %439 = vmatpush1.msra.mxu0 0.0
        %440 = vmatprep.subr.mxu0 0.0
        %441 = vmatpush1.msra.mxu0 0.0
        %442 = vmatprep.subr.mxu0 0.0
        %443 = vmatpush1.msra.mxu0 0.0
        %444 = vmatprep.subr.mxu0 0.0
        %445 = vmatpush1.msra.mxu0 0.0
        %446 = vmatprep.mubr.f32.mxu0 0.0
        %447 = vmatmul.mubr.f32.gmra.mrb[0].mxu0 %v349
        %v448 = vpop.f32.mrb[0].mxu0
        %v449 = vadd.f32 0.0, %v448
        %v450 = vpop.f32.mrb[0].mxu0
        %v451 = vadd.f32 0.0, %v450
        %452 = vdwg.mxu0
        %v453 = vld [vmem:[#allocation2] sm:$0xff]
        %454 = vmatprep.subr.mxu0 0.0
        %455 = vmatpush1.xpose.msra.mxu0 %v449
        %456 = vmatprep.subr.mxu0 0.0
        %457 = vmatpush1.xpose.msra.mxu0 0.0
        %458 = vmatprep.subr.mxu0 0.0
        %459 = vmatpush1.xpose.msra.mxu0 0.0
        %460 = vmatprep.subr.mxu0 0.0
        %461 = vmatpush1.xpose.msra.mxu0 0.0
        %462 = vmatprep.subr.mxu0 0.0
        %463 = vmatpush1.xpose.msra.mxu0 0.0
        %464 = vmatprep.subr.mxu0 0.0
        %465 = vmatpush1.xpose.msra.mxu0 0.0
        %466 = vmatprep.subr.mxu0 0.0
        %467 = vmatpush1.xpose.msra.mxu0 0.0
        %468 = vmatprep.subr.mxu0 0.0
        %469 = vmatpush1.xpose.msra.mxu0 0.0
        %470 = vmatprep.subr.mxu0 0.0
        %471 = vmatpush1.xpose.msra.mxu0 0.0
        %472 = vmatprep.subr.mxu0 0.0
        %473 = vmatpush1.xpose.msra.mxu0 0.0
        %474 = vmatprep.subr.mxu0 0.0
        %475 = vmatpush1.xpose.msra.mxu0 0.0
        %476 = vmatprep.subr.mxu0 0.0
        %477 = vmatpush1.xpose.msra.mxu0 0.0
        %478 = vmatprep.subr.mxu0 0.0
        %479 = vmatpush1.xpose.msra.mxu0 0.0
        %480 = vmatprep.subr.mxu0 0.0
        %481 = vmatpush1.xpose.msra.mxu0 0.0
        %482 = vmatprep.subr.mxu0 0.0
        %483 = vmatpush1.xpose.msra.mxu0 0.0
        %484 = vmatprep.subr.mxu0 0.0
        %485 = vmatpush1.xpose.msra.mxu0 0.0
        %486 = vmatprep.subr.mxu0 0.0
        %487 = vmatpush1.xpose.msra.mxu0 0.0
        %488 = vmatprep.subr.mxu0 0.0
        %489 = vmatpush1.xpose.msra.mxu0 0.0
        %490 = vmatprep.subr.mxu0 0.0
        %491 = vmatpush1.xpose.msra.mxu0 0.0
        %492 = vmatprep.subr.mxu0 0.0
        %493 = vmatpush1.xpose.msra.mxu0 0.0
        %494 = vmatprep.subr.mxu0 0.0
        %495 = vmatpush1.xpose.msra.mxu0 0.0
        %496 = vmatprep.subr.mxu0 0.0
        %497 = vmatpush1.xpose.msra.mxu0 0.0
        %498 = vmatprep.subr.mxu0 0.0
        %499 = vmatpush1.xpose.msra.mxu0 0.0
        %500 = vmatprep.subr.mxu0 0.0
        %501 = vmatpush1.xpose.msra.mxu0 0.0
        %502 = vmatprep.subr.mxu0 0.0
        %503 = vmatpush1.xpose.msra.mxu0 0.0
        %504 = vmatprep.subr.mxu0 0.0
        %505 = vmatpush1.xpose.msra.mxu0 0.0
        %506 = vmatprep.subr.mxu0 0.0
        %507 = vmatpush1.xpose.msra.mxu0 0.0
        %508 = vmatprep.subr.mxu0 0.0
        %509 = vmatpush1.xpose.msra.mxu0 0.0
        %510 = vmatprep.subr.mxu0 0.0
        %511 = vmatpush1.xpose.msra.mxu0 0.0
        %512 = vmatprep.subr.mxu0 0.0
        %513 = vmatpush1.xpose.msra.mxu0 0.0
        %514 = vmatprep.subr.mxu0 0.0
        %515 = vmatpush1.xpose.msra.mxu0 0.0
        %516 = vmatprep.subr.mxu0 0.0
        %517 = vmatpush1.xpose.msra.mxu0 0.0
        %518 = vmatprep.mubr.f32.mxu0 0.0
        %519 = vmatmul.mubr.f32.gmra.mrb[0].mxu0 %v453
        %v520 = vpop.f32.mrb[0].mxu0
        %v521 = vadd.f32 0.0, %v520
        %v522 = vpop.f32.mrb[0].mxu0
        %523 = vdwg.mxu0
        %v524 = vld [vmem:[#allocation3] sm:$0xff]
        %vm525 = vcmask 64512
        %v526 = vsel %vm525, %v521, -inf
        %527 = vmax.xlane.f32.xlu0 %v526
        %v528 = vpop.xlane.xlu0 %527
        %v529 = vmax.f32 %v524, %v528
        %v530 = vsub.f32 %v524, %v529
        %v531 = vmul.f32 %v530, 1.442695
        %v532 = vpow.pop %v531
        %534 = vset.pattern.permute.xlu0 0
        %535 = vperm.xlu0 %534, %v529
        %v536 = vpop.permute.xlu0 %535
        %v538 = vsub.f32 %v521, %v536
        %v539 = vmul.f32 %v538, 1.442695
        %v540 = vpow.pop %v539
        %v541 = vld [vmem:[#allocation4] sm:$0xff]
        %v542 = vmul.f32 %v532, %v541
        %v543 = vsel %vm525, %v540, 0.0
        %544 = vadd.xlane.f32.xlu0 %v543
        %v545 = vpop.xlane.xlu0 %544
        %v546 = vadd.f32 %v542, %v545
        %vm547 = vcmask 7168
        %548 = vst.msk [vmem:[#allocation4] sm:$0xff] %vm547, %v546
        %v549 = vld [vmem:[#allocation5] sm:$0xff]
        %551 = vset.pattern.permute.xlu0 0
        %552 = vperm.xlu0 %551, %v532
        %v553 = vpop.permute.xlu0 %552
        %v555 = vmul.f32 %v553, %v549
        %v557 = vsel %vm525, %v540, 0
        %559 = vmatprep.subr.mxu0 0.0
        %560 = vmatpush1.msra.mxu0 %v451
        %561 = vmatprep.subr.mxu0 0.0
        %562 = vmatpush1.msra.mxu0 0.0
        %563 = vmatprep.subr.mxu0 0.0
        %564 = vmatpush1.msra.mxu0 0.0
        %565 = vmatprep.subr.mxu0 0.0
        %566 = vmatpush1.msra.mxu0 0.0
        %567 = vmatprep.subr.mxu0 0.0
        %568 = vmatpush1.msra.mxu0 0.0
        %569 = vmatprep.subr.mxu0 0.0
        %570 = vmatpush1.msra.mxu0 0.0
        %571 = vmatprep.subr.mxu0 0.0
        %572 = vmatpush1.msra.mxu0 0.0
        %573 = vmatprep.subr.mxu0 0.0
        %574 = vmatpush1.msra.mxu0 0.0
        %575 = vmatprep.subr.mxu0 0.0
        %576 = vmatpush1.msra.mxu0 0.0
        %577 = vmatprep.subr.mxu0 0.0
        %578 = vmatpush1.msra.mxu0 0.0
        %579 = vmatprep.subr.mxu0 0.0
        %580 = vmatpush1.msra.mxu0 0.0
        %581 = vmatprep.subr.mxu0 0.0
        %582 = vmatpush1.msra.mxu0 0.0
        %583 = vmatprep.subr.mxu0 0.0
        %584 = vmatpush1.msra.mxu0 0.0
        %585 = vmatprep.subr.mxu0 0.0
        %586 = vmatpush1.msra.mxu0 0.0
        %587 = vmatprep.subr.mxu0 0.0
        %588 = vmatpush1.msra.mxu0 0.0
        %589 = vmatprep.subr.mxu0 0.0
        %590 = vmatpush1.msra.mxu0 0.0
        %591 = vmatprep.subr.mxu0 0.0
        %592 = vmatpush1.msra.mxu0 0.0
        %593 = vmatprep.subr.mxu0 0.0
        %594 = vmatpush1.msra.mxu0 0.0
        %595 = vmatprep.subr.mxu0 0.0
        %596 = vmatpush1.msra.mxu0 0.0
        %597 = vmatprep.subr.mxu0 0.0
        %598 = vmatpush1.msra.mxu0 0.0
        %599 = vmatprep.subr.mxu0 0.0
        %600 = vmatpush1.msra.mxu0 0.0
        %601 = vmatprep.subr.mxu0 0.0
        %602 = vmatpush1.msra.mxu0 0.0
        %603 = vmatprep.subr.mxu0 0.0
        %604 = vmatpush1.msra.mxu0 0.0
        %605 = vmatprep.subr.mxu0 0.0
        %606 = vmatpush1.msra.mxu0 0.0
        %607 = vmatprep.subr.mxu0 0.0
        %608 = vmatpush1.msra.mxu0 0.0
        %609 = vmatprep.subr.mxu0 0.0
        %610 = vmatpush1.msra.mxu0 0.0
        %611 = vmatprep.subr.mxu0 0.0
        %612 = vmatpush1.msra.mxu0 0.0
        %613 = vmatprep.subr.mxu0 0.0
        %614 = vmatpush1.msra.mxu0 0.0
        %615 = vmatprep.subr.mxu0 0.0
        %616 = vmatpush1.msra.mxu0 0.0
        %617 = vmatprep.subr.mxu0 0.0
        %618 = vmatpush1.msra.mxu0 0.0
        %619 = vmatprep.subr.mxu0 0.0
        %620 = vmatpush1.msra.mxu0 0.0
        %621 = vmatprep.subr.mxu0 0.0
        %622 = vmatpush1.msra.mxu0 0.0
        %623 = vmatprep.mubr.f32.mxu0 0.0
        %624 = vmatmul.mubr.f32.gmra.mrb[0].mxu0 %v557
        %v625 = vpop.f32.mrb[0].mxu0
        %v626 = vadd.f32 0.0, %v625
        %v627 = vpop.f32.mrb[0].mxu0
        %628 = vdwg.mxu0
        %v629 = vadd.f32 %v555, %v626
        %630 = vst [vmem:[#allocation5] sm:$0xff] %v629
        %631 = vst.msk [vmem:[#allocation3] sm:$0xff] %vm547, %v529
        // Predicated region
        $region41: #{basic_attention.1} parent=35 // pred_check
          %p632 = pneg %p253
        $region42: #{basic_attention.1} parent=35 // pred_check_branch
          %634 = sbr.rel (%p632) target = $region44
        $region43: #{basic_attention.1} parent=35 // pred_region
          %v635 = vld [vmem:[#allocation4] sm:$0xff]
          %v636 = vrcp.pop %v635
          %v637 = vld [vmem:[#allocation5] sm:$0xff]
          %639 = vset.pattern.permute.xlu0 0
          %640 = vperm.xlu0 %639, %v636
          %v641 = vpop.permute.xlu0 %640
          %v643 = vmul.f32 %v637, %v641
          %644 = vst [vmem:[%s238] sm:$0xff] %v643
        $region44: #{basic_attention.1} parent=35 // pred_fallthru
          _
        %s645 = sand.u32 %s145, 1
        %s646 = scalar_lea.sflag [#allocation7], %s645
        %s647 = sand.u32 %s145, 1
        %s648 = smul.addr %s647, 8
        %s649 = scalar_lea.vmem [#allocation6], %s648
        // Predicated region
        $region45: #{basic_attention.1} parent=35 // pred_check
          %p650 = pneg %p155
        $region46: #{basic_attention.1} parent=35 // pred_check_branch
          %652 = sbr.rel (%p650) target = $region48
        $region47: #{basic_attention.1} parent=35 // pred_region
          %s654 = ssub.s32 128, 128
          %655 = vsyncadd %s646, %s654
          %s656 = sadd.s32 %s24, %s23
          %s657 = smul.addr %s656, 128
          %s658 = scalar_lea.hbm %s4, %s657
          %s660 = sshll.u32 %s649, 4
          %s661 = int_to_ptr.vmem [resolvable:$true] %s660
          %663 = dma.vmem_to_hbm [thread:$0]  %s661, 128, %s658, %s646
        $region48: #{basic_attention.1} parent=35 // pred_fallthru
          _
      $region36: #{basic_attention.1} parent=5 // pred_fallthru
        _
      %p664 = scmp.le.s32.totalorder 2, %s13
      // Predicated region
      $region49: #{basic_attention.1} parent=5 // pred_check
        %p665 = pneg %p664
      $region50: #{basic_attention.1} parent=5 // pred_check_branch
        %667 = sbr.rel (%p665) target = $region52
      $region51: #{basic_attention.1} parent=5 // pred_region
        %s668 = ssub.s32 %s13, 2
        // Predicated region
        $region53: #{basic_attention.1} parent=51 // pred_check
          %p669 = pneg %p161
        $region54: #{basic_attention.1} parent=51 // pred_check_branch
          %671 = sbr.rel (%p669) target = $region56
        $region55: #{basic_attention.1} parent=51 // pred_region
          %s672 = sand.u32 %s146, 1
          %s673 = scalar_lea.sflag [#allocation7], %s672
          %s674 = sand.u32 %s146, 1
          %s675 = smul.addr %s674, 8
          %s676 = scalar_lea.vmem [#allocation6], %s675
          %677 = dma.done %s673, 128
        $region56: #{basic_attention.1} parent=51 // pred_fallthru
          _
      $region52: #{basic_attention.1} parent=5 // pred_fallthru
        _
    $region6: #{basic_attention.1} parent=1 // loop_footer
      %s17 = sadd.s32 1, %s13
    $region7: #{basic_attention.1} parent=1 // loop_footer_branch
      %12 = sbr.rel target = $region3
    $region8: #{basic_attention.1} parent=1 // loop_exit
      _
    %678 = vsyncpa [#allocation7], 1
    %s679 = scalar_lea.sflag [#allocation7], 1
    %680 = vsyncpa %s679, 1

</llo_original>
